<compile_context>
chip_gen: v6e
topology: v6e:2x2x1
jax: 0.10.0
libtpu: 0.0.40
codegen_flags: <defaults>
</compile_context>

<pallas_src>
import functools

import jax
import jax.numpy as jnp
from jax.experimental import pallas as pl
from jax.experimental.pallas import tpu as pltpu


def basic_block_kernel(x_ref, halo_ref, w1_ref, w2_ref, b1_ref, b2_ref,
                       o_ref, patches_ref, *, W, compute_dtype):
    # Shapes per grid step (nb images folded onto the lane axis, L = nb*H*W):
    #   x_ref       : (Cp, L)     activations, channels on sublanes   (compute_dtype)
    #   halo_ref    : (9, 1, L)   per-tap 0/1 conv-padding masks      (compute_dtype)
    #   w*_ref      : (Cp, 9*Cp)  conv weights with BN scale folded   (compute_dtype)
    #   b*_ref      : (Cp, 1)     folded BN bias                      (f32)
    #   o_ref       : (Cp, L)     output (padded channel rows zero)   (f32)
    #   patches_ref : (9*Cp, L)   VMEM scratch staging the im2col taps
    Cp, L = x_ref.shape

    x_cd = x_ref[...]                         # read once, already in compute_dtype
    xres = x_cd.astype(jnp.float32)           # residual path kept in f32

    def conv3x3(v_cd, w_ref):
        # v_cd: (Cp, L) in compute_dtype.  Stage the 9 taps into the scratch buffer
        # via 8 lane rotations (XLU) + halo masks (VPU, stays in compute_dtype),
        # then ONE MXU matmul (Cp, 9*Cp) @ (9*Cp, L) with f32 accumulation.
        for t in range(9):
            oy, ox = t // 3 - 1, t % 3 - 1
            s = oy * W + ox                                     # flat lane shift
            shifted = v_cd if s == 0 else pltpu.roll(v_cd, (-s) % L, 1)
            # center tap's halo mask is all ones -> skip the multiply
            tap = shifted if t == 4 else shifted * halo_ref[t]
            patches_ref[pl.ds(t * Cp, Cp), :] = tap
        return jnp.dot(w_ref[...], patches_ref[...],
                       preferred_element_type=jnp.float32)      # (Cp, L) f32

    # conv1 (BN1 scale pre-folded into weights) -> +bias -> ReLU
    out1 = jnp.maximum(conv3x3(x_cd, w1_ref) + b1_ref[...], 0.0)
    # conv2 (BN2 scale pre-folded) -> +bias -> +residual -> ReLU
    out2 = conv3x3(out1.astype(compute_dtype), w2_ref) + b2_ref[...] + xres
    o_ref[...] = jnp.maximum(out2, 0.0).astype(o_ref.dtype)


def basic_block_forward(x_nchw, w1_oihw, w2_oihw, bn1, bn2, eps=1e-5,
                        compute_dtype=jnp.bfloat16, images_per_block=None):
    """BasicBlock forward (stride=1, downsample=None). Input/output NCHW.

    images_per_block=None folds the whole batch into one grid step (best on the
    single-TensorCore v5e/v6e); set it to N//2 (or less) on v7x so both
    TensorCores get a "parallel" grid block.
    """
    N, C, H, W = x_nchw.shape
    Cout, Cin = w1_oihw.shape[:2]
    if not (Cin == C and Cout == C and tuple(w2_oihw.shape[:2]) == (C, C)):
        raise ValueError(
            "BasicBlock with stride=1 / downsample=None requires in_planes == planes.")
    HW = H * W

    nb = N if images_per_block is None else int(images_per_block)
    if N % nb != 0:
        raise ValueError("images_per_block must divide the batch size.")
    G = N // nb
    L = nb * HW
    if G > 1 and L % 128 != 0:
        raise ValueError("per-block lane extent must be a multiple of 128 when G > 1.")

    itemsize = jnp.dtype(compute_dtype).itemsize
    sub = 8 * (4 // itemsize)                 # sublane tile: 8 for f32, 16 for bf16
    Cp = -(-C // sub) * sub                   # channels padded to a tile multiple

    # Activations: NCHW -> (C, N*HW) (batch folded onto lanes) -> channel pad ->
    # stored directly in compute_dtype (single HBM copy, half the DMA bytes for bf16).
    x = jnp.transpose(x_nchw, (1, 0, 2, 3)).reshape(C, N * HW)
    x = jnp.pad(x, ((0, Cp - C), (0, 0))).astype(compute_dtype)

    def fold_bn(gamma, beta, mean, var):
        scale = gamma / jnp.sqrt(var + eps)                       # (C,)
        bias = beta - mean * scale                                # (C,)
        return scale, jnp.pad(bias, (0, Cp - C)).reshape(Cp, 1).astype(jnp.float32)

    def pack_w(w, scale):
        # (O, I, 3, 3) scaled per output channel -> (Cp, 9*Cp); column = t*Cp + ci.
        w = (w * scale[:, None, None, None]).astype(jnp.float32)
        w = jnp.transpose(w, (0, 2, 3, 1))                        # (O, ky, kx, I)
        w = jnp.pad(w, ((0, Cp - C), (0, 0), (0, 0), (0, Cp - C)))
        return w.reshape(Cp, 9 * Cp).astype(compute_dtype)

    s1, b1 = fold_bn(*bn1)
    s2, b2 = fold_bn(*bn2)
    w1 = pack_w(w1_oihw, s1)
    w2 = pack_w(w2_oihw, s2)

    # Compile-time halo masks (the convs' padding=1 zero halo), tiled across the nb
    # images of one block; they also zero every cross-image wraparound of the rolls.
    yy = jnp.arange(H, dtype=jnp.int32).reshape(H, 1)
    xx = jnp.arange(W, dtype=jnp.int32).reshape(1, W)

    def tap_mask(t):
        oy, ox = t // 3 - 1, t % 3 - 1
        m = ((yy + oy >= 0) & (yy + oy < H) & (xx + ox >= 0) & (xx + ox < W))
        return jnp.tile(m.reshape(1, HW), (1, nb))
    halo = jnp.stack([tap_mask(t) for t in range(9)]).astype(compute_dtype)  # (9,1,L)

    kernel = functools.partial(basic_block_kernel, W=W, compute_dtype=compute_dtype)

    out = pl.pallas_call(
        kernel,
        out_shape=jax.ShapeDtypeStruct((Cp, N * HW), jnp.float32),
        grid_spec=pltpu.PrefetchScalarGridSpec(
            num_scalar_prefetch=0,
            grid=(G,),
            in_specs=[
                pl.BlockSpec((Cp, L), lambda g: (0, g)),          # activations
                pl.BlockSpec((9, 1, L), lambda g: (0, 0, 0)),     # halo masks (resident)
                pl.BlockSpec((Cp, 9 * Cp), lambda g: (0, 0)),     # conv1 weights (scaled)
                pl.BlockSpec((Cp, 9 * Cp), lambda g: (0, 0)),     # conv2 weights (scaled)
                pl.BlockSpec((Cp, 1), lambda g: (0, 0)),          # bn1 bias
                pl.BlockSpec((Cp, 1), lambda g: (0, 0)),          # bn2 bias
            ],
            out_specs=pl.BlockSpec((Cp, L), lambda g: (0, g)),    # full-Cp lane-dense store
            scratch_shapes=[pltpu.VMEM((9 * Cp, L), compute_dtype)],
        ),
        compiler_params=pltpu.CompilerParams(
            dimension_semantics=("parallel",),
            vmem_limit_bytes=32 * 1024 * 1024),
    )(x, halo, w1, w2, b1, b2)

    # Slice the real channels in the wrapper (keeps the kernel store unmasked).
    return out[:C].reshape(C, N, H, W).transpose(1, 0, 2, 3)


def reference_forward(x, w1, w2, bn1, bn2, eps=1e-5):
    """Pure-JAX NCHW reference mirroring the PyTorch module (eval-mode BN)."""
    def conv(a, w):
        return jax.lax.conv_general_dilated(
            a, w, window_strides=(1, 1), padding=((1, 1), (1, 1)),
            dimension_numbers=("NCHW", "OIHW", "NCHW"),
            precision=jax.lax.Precision.HIGHEST)

    def bn(a, p):
        g, b, m, v = p
        return ((a - m[None, :, None, None])
                / jnp.sqrt(v[None, :, None, None] + eps)
                * g[None, :, None, None] + b[None, :, None, None])

    out = jnp.maximum(bn(conv(x, w1), bn1), 0.0)
    out = bn(conv(out, w2), bn2)
    return jnp.maximum(out + x, 0.0)


if __name__ == "__main__":
    key = jax.random.PRNGKey(0)
    ks = jax.random.split(key, 10)

    N, C, H, W = 2, 4, 16, 16          # in_planes = planes = 4, stride = 1
    planes = C

    x = jax.random.normal(ks[0], (N, C, H, W), jnp.float32)

    w1 = 0.1 * jax.random.normal(ks[1], (planes, C, 3, 3), jnp.float32)
    w2 = 0.1 * jax.random.normal(ks[2], (planes, planes, 3, 3), jnp.float32)

    bn1 = (jax.random.uniform(ks[3], (planes,), minval=0.5, maxval=1.5),
           0.1 * jax.random.normal(ks[4], (planes,)),
           0.1 * jax.random.normal(ks[5], (planes,)),
           jax.random.uniform(ks[6], (planes,), minval=0.5, maxval=1.5))
    bn2 = (jax.random.uniform(ks[7], (planes,), minval=0.5, maxval=1.5),
           0.1 * jax.random.normal(ks[8], (planes,)),
           0.1 * jax.random.normal(ks[9], (planes,)),
           jnp.ones((planes,), jnp.float32))

    ref = reference_forward(x, w1, w2, bn1, bn2)

    # 1) f32 compute path, batch folded into one grid step: tight gate
    #    (catches any layout / roll / halo-mask bug).
    f32_fn = jax.jit(functools.partial(basic_block_forward,
                                       compute_dtype=jnp.float32))
    out_f32 = jax.block_until_ready(f32_fn(x, w1, w2, bn1, bn2))
    assert out_f32.shape == (N, planes, H, W)
    err_f32 = jnp.max(jnp.abs(out_f32 - ref))
    assert jnp.allclose(out_f32, ref, atol=1e-4, rtol=1e-4), f"f32 max abs err {err_f32}"

    # 2) f32 compute path with 2 "parallel" grid blocks (v7x-style split).
    split_fn = jax.jit(functools.partial(basic_block_forward,
                                         compute_dtype=jnp.float32,
                                         images_per_block=1))
    out_split = jax.block_until_ready(split_fn(x, w1, w2, bn1, bn2))
    err_split = jnp.max(jnp.abs(out_split - ref))
    assert jnp.allclose(out_split, ref, atol=1e-4, rtol=1e-4), \
        f"split max abs err {err_split}"

    # 3) default bf16 MXU path (bf16 operands, f32 accumulation/epilogue): bf16 gate.
    bf16_fn = jax.jit(basic_block_forward)
    out_bf16 = jax.block_until_ready(bf16_fn(x, w1, w2, bn1, bn2))
    err_bf16 = jnp.max(jnp.abs(out_bf16 - ref))
    assert jnp.allclose(out_bf16, ref, atol=5e-2, rtol=5e-2), \
        f"bf16 max abs err {err_bf16}"

    print("KERNEL_OK")
</pallas_src>

<mosaic_0001>
module attributes {stable_mosaic.version = 11 : i64} {
  func.func @basic_block_kernel(%arg0: i32, %arg1: memref<8x512xf32, #tpu.memory_space<vmem>>, %arg2: memref<9x1x512xf32, #tpu.memory_space<vmem>>, %arg3: memref<8x72xf32, #tpu.memory_space<vmem>>, %arg4: memref<8x72xf32, #tpu.memory_space<vmem>>, %arg5: memref<8x1xf32, #tpu.memory_space<vmem>>, %arg6: memref<8x1xf32, #tpu.memory_space<vmem>>, %arg7: memref<8x512xf32, #tpu.memory_space<vmem>>, %arg8: memref<72x512xf32, #tpu.memory_space<vmem>>) attributes {dimension_semantics = [#tpu.dimension_semantics<parallel>], iteration_bounds = array<i64: 1>, scalar_prefetch = 0 : i64, scratch_operands = 1 : i64, tpu.core_type = #tpu.core_type<tc>, window_params = [{transform_indices = @transform_0, window_bounds = array<i64: 8, 512>}, {pipeline_mode = #tpu.pipeline_mode<synchronous>, transform_indices = @transform_1, window_bounds = array<i64: 9, 1, 512>}, {pipeline_mode = #tpu.pipeline_mode<synchronous>, transform_indices = @transform_2, window_bounds = array<i64: 8, 72>}, {pipeline_mode = #tpu.pipeline_mode<synchronous>, transform_indices = @transform_3, window_bounds = array<i64: 8, 72>}, {pipeline_mode = #tpu.pipeline_mode<synchronous>, transform_indices = @transform_4, window_bounds = array<i64: 8, 1>}, {pipeline_mode = #tpu.pipeline_mode<synchronous>, transform_indices = @transform_5, window_bounds = array<i64: 8, 1>}, {transform_indices = @transform_6, window_bounds = array<i64: 8, 512>}]} {
    %c0 = arith.constant 0 : index
    %c0_0 = arith.constant 0 : index
    %0 = vector.load %arg1[%c0, %c0_0] : memref<8x512xf32, #tpu.memory_space<vmem>>, vector<8x512xf32>
    %c17_i32 = arith.constant 17 : i32
    %1 = tpu.dynamic_rotate %0 by %c17_i32 dim 1 : vector<8x512xf32>, i32 -> vector<8x512xf32>
    %c0_1 = arith.constant 0 : index
    %c0_2 = arith.constant 0 : index
    %c0_3 = arith.constant 0 : index
    %2 = vector.load %arg2[%c0_1, %c0_2, %c0_3] : memref<9x1x512xf32, #tpu.memory_space<vmem>>, vector<1x1x512xf32>
    %3 = vector.shape_cast %2 : vector<1x1x512xf32> to vector<1x512xf32>
    %4 = vector.broadcast %3 : vector<1x512xf32> to vector<8x512xf32>
    %5 = arith.mulf %1, %4 : vector<8x512xf32>
    %c0_4 = arith.constant 0 : index
    %c0_5 = arith.constant 0 : index
    %6 = vector.load %arg8[%c0_4, %c0_5] : memref<72x512xf32, #tpu.memory_space<vmem>>, vector<8x512xf32>
    tpu.vector_store %arg8[%c0_4, %c0_5], %5 {strides = array<i32>} : memref<72x512xf32, #tpu.memory_space<vmem>>, vector<8x512xf32>,
    %c16_i32 = arith.constant 16 : i32
    %7 = tpu.dynamic_rotate %0 by %c16_i32 dim 1 : vector<8x512xf32>, i32 -> vector<8x512xf32>
    %c1 = arith.constant 1 : index
    %c0_6 = arith.constant 0 : index
    %c0_7 = arith.constant 0 : index
    %8 = vector.load %arg2[%c1, %c0_6, %c0_7] : memref<9x1x512xf32, #tpu.memory_space<vmem>>, vector<1x1x512xf32>
    %9 = vector.shape_cast %8 : vector<1x1x512xf32> to vector<1x512xf32>
    %10 = vector.broadcast %9 : vector<1x512xf32> to vector<8x512xf32>
    %11 = arith.mulf %7, %10 : vector<8x512xf32>
    %c8 = arith.constant 8 : index
    %c0_8 = arith.constant 0 : index
    %12 = vector.load %arg8[%c8, %c0_8] : memref<72x512xf32, #tpu.memory_space<vmem>>, vector<8x512xf32>
    tpu.vector_store %arg8[%c8, %c0_8], %11 {strides = array<i32>} : memref<72x512xf32, #tpu.memory_space<vmem>>, vector<8x512xf32>,
    %c15_i32 = arith.constant 15 : i32
    %13 = tpu.dynamic_rotate %0 by %c15_i32 dim 1 : vector<8x512xf32>, i32 -> vector<8x512xf32>
    %c2 = arith.constant 2 : index
    %c0_9 = arith.constant 0 : index
    %c0_10 = arith.constant 0 : index
    %14 = vector.load %arg2[%c2, %c0_9, %c0_10] : memref<9x1x512xf32, #tpu.memory_space<vmem>>, vector<1x1x512xf32>
    %15 = vector.shape_cast %14 : vector<1x1x512xf32> to vector<1x512xf32>
    %16 = vector.broadcast %15 : vector<1x512xf32> to vector<8x512xf32>
    %17 = arith.mulf %13, %16 : vector<8x512xf32>
    %c16 = arith.constant 16 : index
    %c0_11 = arith.constant 0 : index
    %18 = vector.load %arg8[%c16, %c0_11] : memref<72x512xf32, #tpu.memory_space<vmem>>, vector<8x512xf32>
    tpu.vector_store %arg8[%c16, %c0_11], %17 {strides = array<i32>} : memref<72x512xf32, #tpu.memory_space<vmem>>, vector<8x512xf32>,
    %c1_i32 = arith.constant 1 : i32
    %19 = tpu.dynamic_rotate %0 by %c1_i32 dim 1 : vector<8x512xf32>, i32 -> vector<8x512xf32>
    %c3 = arith.constant 3 : index
    %c0_12 = arith.constant 0 : index
    %c0_13 = arith.constant 0 : index
    %20 = vector.load %arg2[%c3, %c0_12, %c0_13] : memref<9x1x512xf32, #tpu.memory_space<vmem>>, vector<1x1x512xf32>
    %21 = vector.shape_cast %20 : vector<1x1x512xf32> to vector<1x512xf32>
    %22 = vector.broadcast %21 : vector<1x512xf32> to vector<8x512xf32>
    %23 = arith.mulf %19, %22 : vector<8x512xf32>
    %c24 = arith.constant 24 : index
    %c0_14 = arith.constant 0 : index
    %24 = vector.load %arg8[%c24, %c0_14] : memref<72x512xf32, #tpu.memory_space<vmem>>, vector<8x512xf32>
    tpu.vector_store %arg8[%c24, %c0_14], %23 {strides = array<i32>} : memref<72x512xf32, #tpu.memory_space<vmem>>, vector<8x512xf32>,
    %c32 = arith.constant 32 : index
    %c0_15 = arith.constant 0 : index
    %25 = vector.load %arg8[%c32, %c0_15] : memref<72x512xf32, #tpu.memory_space<vmem>>, vector<8x512xf32>
    tpu.vector_store %arg8[%c32, %c0_15], %0 {strides = array<i32>} : memref<72x512xf32, #tpu.memory_space<vmem>>, vector<8x512xf32>,
    %c511_i32 = arith.constant 511 : i32
    %26 = tpu.dynamic_rotate %0 by %c511_i32 dim 1 : vector<8x512xf32>, i32 -> vector<8x512xf32>
    %c5 = arith.constant 5 : index
    %c0_16 = arith.constant 0 : index
    %c0_17 = arith.constant 0 : index
    %27 = vector.load %arg2[%c5, %c0_16, %c0_17] : memref<9x1x512xf32, #tpu.memory_space<vmem>>, vector<1x1x512xf32>
    %28 = vector.shape_cast %27 : vector<1x1x512xf32> to vector<1x512xf32>
    %29 = vector.broadcast %28 : vector<1x512xf32> to vector<8x512xf32>
    %30 = arith.mulf %26, %29 : vector<8x512xf32>
    %c40 = arith.constant 40 : index
    %c0_18 = arith.constant 0 : index
    %31 = vector.load %arg8[%c40, %c0_18] : memref<72x512xf32, #tpu.memory_space<vmem>>, vector<8x512xf32>
    tpu.vector_store %arg8[%c40, %c0_18], %30 {strides = array<i32>} : memref<72x512xf32, #tpu.memory_space<vmem>>, vector<8x512xf32>,
    %c497_i32 = arith.constant 497 : i32
    %32 = tpu.dynamic_rotate %0 by %c497_i32 dim 1 : vector<8x512xf32>, i32 -> vector<8x512xf32>
    %c6 = arith.constant 6 : index
    %c0_19 = arith.constant 0 : index
    %c0_20 = arith.constant 0 : index
    %33 = vector.load %arg2[%c6, %c0_19, %c0_20] : memref<9x1x512xf32, #tpu.memory_space<vmem>>, vector<1x1x512xf32>
    %34 = vector.shape_cast %33 : vector<1x1x512xf32> to vector<1x512xf32>
    %35 = vector.broadcast %34 : vector<1x512xf32> to vector<8x512xf32>
    %36 = arith.mulf %32, %35 : vector<8x512xf32>
    %c48 = arith.constant 48 : index
    %c0_21 = arith.constant 0 : index
    %37 = vector.load %arg8[%c48, %c0_21] : memref<72x512xf32, #tpu.memory_space<vmem>>, vector<8x512xf32>
    tpu.vector_store %arg8[%c48, %c0_21], %36 {strides = array<i32>} : memref<72x512xf32, #tpu.memory_space<vmem>>, vector<8x512xf32>,
    %c496_i32 = arith.constant 496 : i32
    %38 = tpu.dynamic_rotate %0 by %c496_i32 dim 1 : vector<8x512xf32>, i32 -> vector<8x512xf32>
    %c7 = arith.constant 7 : index
    %c0_22 = arith.constant 0 : index
    %c0_23 = arith.constant 0 : index
    %39 = vector.load %arg2[%c7, %c0_22, %c0_23] : memref<9x1x512xf32, #tpu.memory_space<vmem>>, vector<1x1x512xf32>
    %40 = vector.shape_cast %39 : vector<1x1x512xf32> to vector<1x512xf32>
    %41 = vector.broadcast %40 : vector<1x512xf32> to vector<8x512xf32>
    %42 = arith.mulf %38, %41 : vector<8x512xf32>
    %c56 = arith.constant 56 : index
    %c0_24 = arith.constant 0 : index
    %43 = vector.load %arg8[%c56, %c0_24] : memref<72x512xf32, #tpu.memory_space<vmem>>, vector<8x512xf32>
    tpu.vector_store %arg8[%c56, %c0_24], %42 {strides = array<i32>} : memref<72x512xf32, #tpu.memory_space<vmem>>, vector<8x512xf32>,
    %c495_i32 = arith.constant 495 : i32
    %44 = tpu.dynamic_rotate %0 by %c495_i32 dim 1 : vector<8x512xf32>, i32 -> vector<8x512xf32>
    %c8_25 = arith.constant 8 : index
    %c0_26 = arith.constant 0 : index
    %c0_27 = arith.constant 0 : index
    %45 = vector.load %arg2[%c8_25, %c0_26, %c0_27] : memref<9x1x512xf32, #tpu.memory_space<vmem>>, vector<1x1x512xf32>
    %46 = vector.shape_cast %45 : vector<1x1x512xf32> to vector<1x512xf32>
    %47 = vector.broadcast %46 : vector<1x512xf32> to vector<8x512xf32>
    %48 = arith.mulf %44, %47 : vector<8x512xf32>
    %c64 = arith.constant 64 : index
    %c0_28 = arith.constant 0 : index
    %49 = vector.load %arg8[%c64, %c0_28] : memref<72x512xf32, #tpu.memory_space<vmem>>, vector<8x512xf32>
    tpu.vector_store %arg8[%c64, %c0_28], %48 {strides = array<i32>} : memref<72x512xf32, #tpu.memory_space<vmem>>, vector<8x512xf32>,
    %c0_29 = arith.constant 0 : index
    %c0_30 = arith.constant 0 : index
    %50 = vector.load %arg3[%c0_29, %c0_30] : memref<8x72xf32, #tpu.memory_space<vmem>>, vector<8x72xf32>
    %c0_31 = arith.constant 0 : index
    %c0_32 = arith.constant 0 : index
    %51 = vector.load %arg8[%c0_31, %c0_32] : memref<72x512xf32, #tpu.memory_space<vmem>>, vector<72x512xf32>
    %cst = arith.constant dense<0.000000e+00> : vector<8x512xf32>
    %52 = tpu.matmul %50, %51, %cst {dimension_numbers = #tpu.dot_dimension_numbers<[1], [0], [0], [1], [0, 0, 1, 1], [], []>} : vector<8x72xf32>, vector<72x512xf32>, vector<8x512xf32> -> vector<8x512xf32>
    %c0_33 = arith.constant 0 : index
    %c0_34 = arith.constant 0 : index
    %53 = vector.load %arg5[%c0_33, %c0_34] : memref<8x1xf32, #tpu.memory_space<vmem>>, vector<8x1xf32>
    %54 = vector.broadcast %53 : vector<8x1xf32> to vector<8x512xf32>
    %55 = arith.addf %52, %54 : vector<8x512xf32>
    %cst_35 = arith.constant 0.000000e+00 : f32
    %56 = vector.broadcast %cst_35 : f32 to vector<8x512xf32>
    %57 = arith.maximumf %55, %56 : vector<8x512xf32>
    %c17_i32_36 = arith.constant 17 : i32
    %58 = tpu.dynamic_rotate %57 by %c17_i32_36 dim 1 : vector<8x512xf32>, i32 -> vector<8x512xf32>
    %c0_37 = arith.constant 0 : index
    %c0_38 = arith.constant 0 : index
    %c0_39 = arith.constant 0 : index
    %59 = vector.load %arg2[%c0_37, %c0_38, %c0_39] : memref<9x1x512xf32, #tpu.memory_space<vmem>>, vector<1x1x512xf32>
    %60 = vector.shape_cast %59 : vector<1x1x512xf32> to vector<1x512xf32>
    %61 = vector.broadcast %60 : vector<1x512xf32> to vector<8x512xf32>
    %62 = arith.mulf %58, %61 : vector<8x512xf32>
    %c0_40 = arith.constant 0 : index
    %c0_41 = arith.constant 0 : index
    %63 = vector.load %arg8[%c0_40, %c0_41] : memref<72x512xf32, #tpu.memory_space<vmem>>, vector<8x512xf32>
    tpu.vector_store %arg8[%c0_40, %c0_41], %62 {strides = array<i32>} : memref<72x512xf32, #tpu.memory_space<vmem>>, vector<8x512xf32>,
    %c16_i32_42 = arith.constant 16 : i32
    %64 = tpu.dynamic_rotate %57 by %c16_i32_42 dim 1 : vector<8x512xf32>, i32 -> vector<8x512xf32>
    %c1_43 = arith.constant 1 : index
    %c0_44 = arith.constant 0 : index
    %c0_45 = arith.constant 0 : index
    %65 = vector.load %arg2[%c1_43, %c0_44, %c0_45] : memref<9x1x512xf32, #tpu.memory_space<vmem>>, vector<1x1x512xf32>
    %66 = vector.shape_cast %65 : vector<1x1x512xf32> to vector<1x512xf32>
    %67 = vector.broadcast %66 : vector<1x512xf32> to vector<8x512xf32>
    %68 = arith.mulf %64, %67 : vector<8x512xf32>
    %c8_46 = arith.constant 8 : index
    %c0_47 = arith.constant 0 : index
    %69 = vector.load %arg8[%c8_46, %c0_47] : memref<72x512xf32, #tpu.memory_space<vmem>>, vector<8x512xf32>
    tpu.vector_store %arg8[%c8_46, %c0_47], %68 {strides = array<i32>} : memref<72x512xf32, #tpu.memory_space<vmem>>, vector<8x512xf32>,
    %c15_i32_48 = arith.constant 15 : i32
    %70 = tpu.dynamic_rotate %57 by %c15_i32_48 dim 1 : vector<8x512xf32>, i32 -> vector<8x512xf32>
    %c2_49 = arith.constant 2 : index
    %c0_50 = arith.constant 0 : index
    %c0_51 = arith.constant 0 : index
    %71 = vector.load %arg2[%c2_49, %c0_50, %c0_51] : memref<9x1x512xf32, #tpu.memory_space<vmem>>, vector<1x1x512xf32>
    %72 = vector.shape_cast %71 : vector<1x1x512xf32> to vector<1x512xf32>
    %73 = vector.broadcast %72 : vector<1x512xf32> to vector<8x512xf32>
    %74 = arith.mulf %70, %73 : vector<8x512xf32>
    %c16_52 = arith.constant 16 : index
    %c0_53 = arith.constant 0 : index
    %75 = vector.load %arg8[%c16_52, %c0_53] : memref<72x512xf32, #tpu.memory_space<vmem>>, vector<8x512xf32>
    tpu.vector_store %arg8[%c16_52, %c0_53], %74 {strides = array<i32>} : memref<72x512xf32, #tpu.memory_space<vmem>>, vector<8x512xf32>,
    %c1_i32_54 = arith.constant 1 : i32
    %76 = tpu.dynamic_rotate %57 by %c1_i32_54 dim 1 : vector<8x512xf32>, i32 -> vector<8x512xf32>
    %c3_55 = arith.constant 3 : index
    %c0_56 = arith.constant 0 : index
    %c0_57 = arith.constant 0 : index
    %77 = vector.load %arg2[%c3_55, %c0_56, %c0_57] : memref<9x1x512xf32, #tpu.memory_space<vmem>>, vector<1x1x512xf32>
    %78 = vector.shape_cast %77 : vector<1x1x512xf32> to vector<1x512xf32>
    %79 = vector.broadcast %78 : vector<1x512xf32> to vector<8x512xf32>
    %80 = arith.mulf %76, %79 : vector<8x512xf32>
    %c24_58 = arith.constant 24 : index
    %c0_59 = arith.constant 0 : index
    %81 = vector.load %arg8[%c24_58, %c0_59] : memref<72x512xf32, #tpu.memory_space<vmem>>, vector<8x512xf32>
    tpu.vector_store %arg8[%c24_58, %c0_59], %80 {strides = array<i32>} : memref<72x512xf32, #tpu.memory_space<vmem>>, vector<8x512xf32>,
    %c32_60 = arith.constant 32 : index
    %c0_61 = arith.constant 0 : index
    %82 = vector.load %arg8[%c32_60, %c0_61] : memref<72x512xf32, #tpu.memory_space<vmem>>, vector<8x512xf32>
    tpu.vector_store %arg8[%c32_60, %c0_61], %57 {strides = array<i32>} : memref<72x512xf32, #tpu.memory_space<vmem>>, vector<8x512xf32>,
    %c511_i32_62 = arith.constant 511 : i32
    %83 = tpu.dynamic_rotate %57 by %c511_i32_62 dim 1 : vector<8x512xf32>, i32 -> vector<8x512xf32>
    %c5_63 = arith.constant 5 : index
    %c0_64 = arith.constant 0 : index
    %c0_65 = arith.constant 0 : index
    %84 = vector.load %arg2[%c5_63, %c0_64, %c0_65] : memref<9x1x512xf32, #tpu.memory_space<vmem>>, vector<1x1x512xf32>
    %85 = vector.shape_cast %84 : vector<1x1x512xf32> to vector<1x512xf32>
    %86 = vector.broadcast %85 : vector<1x512xf32> to vector<8x512xf32>
    %87 = arith.mulf %83, %86 : vector<8x512xf32>
    %c40_66 = arith.constant 40 : index
    %c0_67 = arith.constant 0 : index
    %88 = vector.load %arg8[%c40_66, %c0_67] : memref<72x512xf32, #tpu.memory_space<vmem>>, vector<8x512xf32>
    tpu.vector_store %arg8[%c40_66, %c0_67], %87 {strides = array<i32>} : memref<72x512xf32, #tpu.memory_space<vmem>>, vector<8x512xf32>,
    %c497_i32_68 = arith.constant 497 : i32
    %89 = tpu.dynamic_rotate %57 by %c497_i32_68 dim 1 : vector<8x512xf32>, i32 -> vector<8x512xf32>
    %c6_69 = arith.constant 6 : index
    %c0_70 = arith.constant 0 : index
    %c0_71 = arith.constant 0 : index
    %90 = vector.load %arg2[%c6_69, %c0_70, %c0_71] : memref<9x1x512xf32, #tpu.memory_space<vmem>>, vector<1x1x512xf32>
    %91 = vector.shape_cast %90 : vector<1x1x512xf32> to vector<1x512xf32>
    %92 = vector.broadcast %91 : vector<1x512xf32> to vector<8x512xf32>
    %93 = arith.mulf %89, %92 : vector<8x512xf32>
    %c48_72 = arith.constant 48 : index
    %c0_73 = arith.constant 0 : index
    %94 = vector.load %arg8[%c48_72, %c0_73] : memref<72x512xf32, #tpu.memory_space<vmem>>, vector<8x512xf32>
    tpu.vector_store %arg8[%c48_72, %c0_73], %93 {strides = array<i32>} : memref<72x512xf32, #tpu.memory_space<vmem>>, vector<8x512xf32>,
    %c496_i32_74 = arith.constant 496 : i32
    %95 = tpu.dynamic_rotate %57 by %c496_i32_74 dim 1 : vector<8x512xf32>, i32 -> vector<8x512xf32>
    %c7_75 = arith.constant 7 : index
    %c0_76 = arith.constant 0 : index
    %c0_77 = arith.constant 0 : index
    %96 = vector.load %arg2[%c7_75, %c0_76, %c0_77] : memref<9x1x512xf32, #tpu.memory_space<vmem>>, vector<1x1x512xf32>
    %97 = vector.shape_cast %96 : vector<1x1x512xf32> to vector<1x512xf32>
    %98 = vector.broadcast %97 : vector<1x512xf32> to vector<8x512xf32>
    %99 = arith.mulf %95, %98 : vector<8x512xf32>
    %c56_78 = arith.constant 56 : index
    %c0_79 = arith.constant 0 : index
    %100 = vector.load %arg8[%c56_78, %c0_79] : memref<72x512xf32, #tpu.memory_space<vmem>>, vector<8x512xf32>
    tpu.vector_store %arg8[%c56_78, %c0_79], %99 {strides = array<i32>} : memref<72x512xf32, #tpu.memory_space<vmem>>, vector<8x512xf32>,
    %c495_i32_80 = arith.constant 495 : i32
    %101 = tpu.dynamic_rotate %57 by %c495_i32_80 dim 1 : vector<8x512xf32>, i32 -> vector<8x512xf32>
    %c8_81 = arith.constant 8 : index
    %c0_82 = arith.constant 0 : index
    %c0_83 = arith.constant 0 : index
    %102 = vector.load %arg2[%c8_81, %c0_82, %c0_83] : memref<9x1x512xf32, #tpu.memory_space<vmem>>, vector<1x1x512xf32>
    %103 = vector.shape_cast %102 : vector<1x1x512xf32> to vector<1x512xf32>
    %104 = vector.broadcast %103 : vector<1x512xf32> to vector<8x512xf32>
    %105 = arith.mulf %101, %104 : vector<8x512xf32>
    %c64_84 = arith.constant 64 : index
    %c0_85 = arith.constant 0 : index
    %106 = vector.load %arg8[%c64_84, %c0_85] : memref<72x512xf32, #tpu.memory_space<vmem>>, vector<8x512xf32>
    tpu.vector_store %arg8[%c64_84, %c0_85], %105 {strides = array<i32>} : memref<72x512xf32, #tpu.memory_space<vmem>>, vector<8x512xf32>,
    %c0_86 = arith.constant 0 : index
    %c0_87 = arith.constant 0 : index
    %107 = vector.load %arg4[%c0_86, %c0_87] : memref<8x72xf32, #tpu.memory_space<vmem>>, vector<8x72xf32>
    %c0_88 = arith.constant 0 : index
    %c0_89 = arith.constant 0 : index
    %108 = vector.load %arg8[%c0_88, %c0_89] : memref<72x512xf32, #tpu.memory_space<vmem>>, vector<72x512xf32>
    %cst_90 = arith.constant dense<0.000000e+00> : vector<8x512xf32>
    %109 = tpu.matmul %107, %108, %cst_90 {dimension_numbers = #tpu.dot_dimension_numbers<[1], [0], [0], [1], [0, 0, 1, 1], [], []>} : vector<8x72xf32>, vector<72x512xf32>, vector<8x512xf32> -> vector<8x512xf32>
    %c0_91 = arith.constant 0 : index
    %c0_92 = arith.constant 0 : index
    %110 = vector.load %arg6[%c0_91, %c0_92] : memref<8x1xf32, #tpu.memory_space<vmem>>, vector<8x1xf32>
    %111 = vector.broadcast %110 : vector<8x1xf32> to vector<8x512xf32>
    %112 = arith.addf %109, %111 : vector<8x512xf32>
    %113 = arith.addf %112, %0 : vector<8x512xf32>
    %cst_93 = arith.constant 0.000000e+00 : f32
    %114 = vector.broadcast %cst_93 : f32 to vector<8x512xf32>
    %115 = arith.maximumf %113, %114 : vector<8x512xf32>
    %c0_94 = arith.constant 0 : index
    %c0_95 = arith.constant 0 : index
    %116 = vector.load %arg7[%c0_94, %c0_95] : memref<8x512xf32, #tpu.memory_space<vmem>>, vector<8x512xf32>
    tpu.vector_store %arg7[%c0_94, %c0_95], %115 {strides = array<i32>} : memref<8x512xf32, #tpu.memory_space<vmem>>, vector<8x512xf32>,
    return
  }
  func.func @transform_0(%arg0: i32) -> (i32, i32) {
    %c0_i32 = arith.constant 0 : i32
    %c0_i32_0 = arith.constant 0 : i32
    return %c0_i32, %arg0 : i32, i32
  }
  func.func @transform_1(%arg0: i32) -> (i32, i32, i32) {
    %c0_i32 = arith.constant 0 : i32
    %c0_i32_0 = arith.constant 0 : i32
    %c0_i32_1 = arith.constant 0 : i32
    %c0_i32_2 = arith.constant 0 : i32
    return %c0_i32, %c0_i32_0, %c0_i32_1 : i32, i32, i32
  }
  func.func @transform_2(%arg0: i32) -> (i32, i32) {
    %c0_i32 = arith.constant 0 : i32
    %c0_i32_0 = arith.constant 0 : i32
    %c0_i32_1 = arith.constant 0 : i32
    return %c0_i32, %c0_i32_0 : i32, i32
  }
  func.func @transform_3(%arg0: i32) -> (i32, i32) {
    %c0_i32 = arith.constant 0 : i32
    %c0_i32_0 = arith.constant 0 : i32
    %c0_i32_1 = arith.constant 0 : i32
    return %c0_i32, %c0_i32_0 : i32, i32
  }
  func.func @transform_4(%arg0: i32) -> (i32, i32) {
    %c0_i32 = arith.constant 0 : i32
    %c0_i32_0 = arith.constant 0 : i32
    %c0_i32_1 = arith.constant 0 : i32
    return %c0_i32, %c0_i32_0 : i32, i32
  }
  func.func @transform_5(%arg0: i32) -> (i32, i32) {
    %c0_i32 = arith.constant 0 : i32
    %c0_i32_0 = arith.constant 0 : i32
    %c0_i32_1 = arith.constant 0 : i32
    return %c0_i32, %c0_i32_0 : i32, i32
  }
  func.func @transform_6(%arg0: i32) -> (i32, i32) {
    %c0_i32 = arith.constant 0 : i32
    %c0_i32_0 = arith.constant 0 : i32
    return %c0_i32, %arg0 : i32, i32
  }
}

</mosaic_0001>

<llo_original>
// kernel: basic_block_forward.1
$region0: #{basic_block_forward.1}
  #allocation0 [shape = 'u32[]', space=smem, size = 0x4, offset = 0x4, fixed_abs, tag = 'smem constant byte address 0x4 - core index']
  #allocation1 [shape = 'u32[144,128]{1,0:T(1,128)}', space=vmem, size = 0x12000, scoped, tag = 'internal scratch']
  #allocation2 [shape = 'f32[72,512]{1,0:T(8,128)}', space=vmem, size = 0x24000, scoped, tag = 'scratch operand']
  %s0 = inlined_call_operand.vmem [shape: f32[8,512], index: 0, kind: input, shape index: {}]
  %s1 = inlined_call_operand.vmem [shape: f32[9,1,512], index: 1, kind: input, shape index: {}]
  %s2 = inlined_call_operand.vmem [shape: f32[8,72], index: 2, kind: input, shape index: {}]
  %s3 = inlined_call_operand.vmem [shape: f32[8,72], index: 3, kind: input, shape index: {}]
  %s4 = inlined_call_operand.vmem [shape: f32[8,1], index: 4, kind: input, shape index: {}]
  %s5 = inlined_call_operand.vmem [shape: f32[8,1], index: 5, kind: input, shape index: {}]
  %s6 = inlined_call_operand.vmem [shape: f32[8,512], index: 6, kind: output, shape index: {}]
  %s7 = sld [smem:[#allocation0]]
  $region34: #{basic_block_forward.1} parent=0
    _
  %s9 = ssub.s32 1, %s7
  %s10 = scalar_select 0, %s9, %s7
  // Predicated region
  $region2: #{basic_block_forward.1} parent=0 // pred_check
    _
  $region3: #{basic_block_forward.1} parent=0 // pred_check_branch
    %12 = sbr.rel (0) target = $region5
  $region4: #{basic_block_forward.1} parent=0 // pred_region
    _
  $region5: #{basic_block_forward.1} parent=0 // pred_fallthru
    _
  // Predicated region
  $region6: #{basic_block_forward.1} parent=0 // pred_check
    _
  $region7: #{basic_block_forward.1} parent=0 // pred_check_branch
    %14 = sbr.rel (0) target = $region9
  $region8: #{basic_block_forward.1} parent=0 // pred_region
    _
  $region9: #{basic_block_forward.1} parent=0 // pred_fallthru
    _
  // Predicated region
  $region10: #{basic_block_forward.1} parent=0 // pred_check
    _
  $region11: #{basic_block_forward.1} parent=0 // pred_check_branch
    %16 = sbr.rel (0) target = $region13
  $region12: #{basic_block_forward.1} parent=0 // pred_region
    _
  $region13: #{basic_block_forward.1} parent=0 // pred_fallthru
    _
  // Predicated region
  $region14: #{basic_block_forward.1} parent=0 // pred_check
    _
  $region15: #{basic_block_forward.1} parent=0 // pred_check_branch
    %18 = sbr.rel (0) target = $region17
  $region16: #{basic_block_forward.1} parent=0 // pred_region
    _
  $region17: #{basic_block_forward.1} parent=0 // pred_fallthru
    _
  // Predicated region
  $region18: #{basic_block_forward.1} parent=0 // pred_check
    _
  $region19: #{basic_block_forward.1} parent=0 // pred_check_branch
    %20 = sbr.rel (0) target = $region21
  $region20: #{basic_block_forward.1} parent=0 // pred_region
    _
  $region21: #{basic_block_forward.1} parent=0 // pred_fallthru
    _
  // Predicated region
  $region22: #{basic_block_forward.1} parent=0 // pred_check
    _
  $region23: #{basic_block_forward.1} parent=0 // pred_check_branch
    %22 = sbr.rel (0) target = $region25
  $region24: #{basic_block_forward.1} parent=0 // pred_region
    _
  $region25: #{basic_block_forward.1} parent=0 // pred_fallthru
    _
  %v23 = vld [vmem:[%s0] sm:$0xff]
  %v24 = vld [vmem:[%s0 + $0x8] sm:$0xff]
  %v25 = vld [vmem:[%s0 + $0x10] sm:$0xff]
  %v26 = vld [vmem:[%s0 + $0x18] sm:$0xff]
  %27 = vrot.lane.b32.xlu0 %v23, 17
  %v28 = vpop.permute.xlu0 %27
  %29 = vrot.lane.b32.xlu0 %v24, 17
  %v30 = vpop.permute.xlu0 %29
  %31 = vrot.lane.b32.xlu0 %v25, 17
  %v32 = vpop.permute.xlu0 %31
  %33 = vrot.lane.b32.xlu0 %v26, 17
  %v34 = vpop.permute.xlu0 %33
  %v35 = vlaneseq
  %v36 = vand.u32 %v35, 127
  %vm37 = vcmp.lt.s32.totalorder %v36, 17
  %v38 = vsel %vm37, %v32, %v34
  %v39 = vsel %vm37, %v30, %v32
  %v40 = vsel %vm37, %v28, %v30
  %v41 = vsel %vm37, %v34, %v28
  %v42 = vld [vmem:[%s1] sm:$0xf]
  %v44 = vlaneseq
  %v45 = vshrl.u32 %v44, 7
  %v46 = vsub.s32 0, %v45
  %v47 = vrot.slane %v42, %v46
  %v48 = vlaneseq
  %v49 = vshrl.u32 %v48, 7
  %v50 = vsub.s32 1, %v49
  %v51 = vrot.slane %v42, %v50
  %v52 = vlaneseq
  %v53 = vshrl.u32 %v52, 7
  %v54 = vsub.s32 2, %v53
  %v55 = vrot.slane %v42, %v54
  %v56 = vlaneseq
  %v57 = vshrl.u32 %v56, 7
  %v58 = vsub.s32 3, %v57
  %v59 = vrot.slane %v42, %v58
  %v64 = vmul.f32 %v41, %v47
  %v65 = vmul.f32 %v40, %v51
  %v66 = vmul.f32 %v39, %v55
  %v67 = vmul.f32 %v38, %v59
  %68 = vst [vmem:[#allocation2] sm:$0xff] %v64
  %69 = vst [vmem:[#allocation2 + $0x8] sm:$0xff] %v65
  %70 = vst [vmem:[#allocation2 + $0x10] sm:$0xff] %v66
  %71 = vst [vmem:[#allocation2 + $0x18] sm:$0xff] %v67
  %72 = vrot.lane.b32.xlu0 %v23, 16
  %v73 = vpop.permute.xlu0 %72
  %74 = vrot.lane.b32.xlu0 %v24, 16
  %v75 = vpop.permute.xlu0 %74
  %76 = vrot.lane.b32.xlu0 %v25, 16
  %v77 = vpop.permute.xlu0 %76
  %78 = vrot.lane.b32.xlu0 %v26, 16
  %v79 = vpop.permute.xlu0 %78
  %vm80 = vcmp.lt.s32.totalorder %v36, 16
  %v81 = vsel %vm80, %v77, %v79
  %v82 = vsel %vm80, %v75, %v77
  %v83 = vsel %vm80, %v73, %v75
  %v84 = vsel %vm80, %v79, %v73
  %s85 = scalar_lea.vmem %s1, 4
  %v86 = vld [vmem:[%s85] sm:$0xf]
  %v88 = vlaneseq
  %v89 = vshrl.u32 %v88, 7
  %v90 = vsub.s32 0, %v89
  %v91 = vrot.slane %v86, %v90
  %v92 = vlaneseq
  %v93 = vshrl.u32 %v92, 7
  %v94 = vsub.s32 1, %v93
  %v95 = vrot.slane %v86, %v94
  %v96 = vlaneseq
  %v97 = vshrl.u32 %v96, 7
  %v98 = vsub.s32 2, %v97
  %v99 = vrot.slane %v86, %v98
  %v100 = vlaneseq
  %v101 = vshrl.u32 %v100, 7
  %v102 = vsub.s32 3, %v101
  %v103 = vrot.slane %v86, %v102
  %v108 = vmul.f32 %v84, %v91
  %v109 = vmul.f32 %v83, %v95
  %v110 = vmul.f32 %v82, %v99
  %v111 = vmul.f32 %v81, %v103
  %112 = vst [vmem:[#allocation2 + $0x20] sm:$0xff] %v108
  %113 = vst [vmem:[#allocation2 + $0x28] sm:$0xff] %v109
  %114 = vst [vmem:[#allocation2 + $0x30] sm:$0xff] %v110
  %115 = vst [vmem:[#allocation2 + $0x38] sm:$0xff] %v111
  %116 = vrot.lane.b32.xlu0 %v23, 15
  %v117 = vpop.permute.xlu0 %116
  %118 = vrot.lane.b32.xlu0 %v24, 15
  %v119 = vpop.permute.xlu0 %118
  %120 = vrot.lane.b32.xlu0 %v25, 15
  %v121 = vpop.permute.xlu0 %120
  %122 = vrot.lane.b32.xlu0 %v26, 15
  %v123 = vpop.permute.xlu0 %122
  %vm124 = vcmp.lt.s32.totalorder %v36, 15
  %v125 = vsel %vm124, %v121, %v123
  %v126 = vsel %vm124, %v119, %v121
  %v127 = vsel %vm124, %v117, %v119
  %v128 = vsel %vm124, %v123, %v117
  %s129 = scalar_lea.vmem %s1, 8
  %v130 = vld [vmem:[%s129] sm:$0xf]
  %v132 = vlaneseq
  %v133 = vshrl.u32 %v132, 7
  %v134 = vsub.s32 0, %v133
  %v135 = vrot.slane %v130, %v134
  %v136 = vlaneseq
  %v137 = vshrl.u32 %v136, 7
  %v138 = vsub.s32 1, %v137
  %v139 = vrot.slane %v130, %v138
  %v140 = vlaneseq
  %v141 = vshrl.u32 %v140, 7
  %v142 = vsub.s32 2, %v141
  %v143 = vrot.slane %v130, %v142
  %v144 = vlaneseq
  %v145 = vshrl.u32 %v144, 7
  %v146 = vsub.s32 3, %v145
  %v147 = vrot.slane %v130, %v146
  %v152 = vmul.f32 %v128, %v135
  %v153 = vmul.f32 %v127, %v139
  %v154 = vmul.f32 %v126, %v143
  %v155 = vmul.f32 %v125, %v147
  %156 = vst [vmem:[#allocation2 + $0x40] sm:$0xff] %v152
  %157 = vst [vmem:[#allocation2 + $0x48] sm:$0xff] %v153
  %158 = vst [vmem:[#allocation2 + $0x50] sm:$0xff] %v154
  %159 = vst [vmem:[#allocation2 + $0x58] sm:$0xff] %v155
  %160 = vrot.lane.b32.xlu0 %v23, 1
  %v161 = vpop.permute.xlu0 %160
  %162 = vrot.lane.b32.xlu0 %v24, 1
  %v163 = vpop.permute.xlu0 %162
  %164 = vrot.lane.b32.xlu0 %v25, 1
  %v165 = vpop.permute.xlu0 %164
  %166 = vrot.lane.b32.xlu0 %v26, 1
  %v167 = vpop.permute.xlu0 %166
  %vm168 = vcmp.lt.s32.totalorder %v36, 1
  %v169 = vsel %vm168, %v165, %v167
  %v170 = vsel %vm168, %v163, %v165
  %v171 = vsel %vm168, %v161, %v163
  %v172 = vsel %vm168, %v167, %v161
  %s173 = scalar_lea.vmem %s1, 12
  %v174 = vld [vmem:[%s173] sm:$0xf]
  %v176 = vlaneseq
  %v177 = vshrl.u32 %v176, 7
  %v178 = vsub.s32 0, %v177
  %v179 = vrot.slane %v174, %v178
  %v180 = vlaneseq
  %v181 = vshrl.u32 %v180, 7
  %v182 = vsub.s32 1, %v181
  %v183 = vrot.slane %v174, %v182
  %v184 = vlaneseq
  %v185 = vshrl.u32 %v184, 7
  %v186 = vsub.s32 2, %v185
  %v187 = vrot.slane %v174, %v186
  %v188 = vlaneseq
  %v189 = vshrl.u32 %v188, 7
  %v190 = vsub.s32 3, %v189
  %v191 = vrot.slane %v174, %v190
  %v196 = vmul.f32 %v172, %v179
  %v197 = vmul.f32 %v171, %v183
  %v198 = vmul.f32 %v170, %v187
  %v199 = vmul.f32 %v169, %v191
  %200 = vst [vmem:[#allocation2 + $0x60] sm:$0xff] %v196
  %201 = vst [vmem:[#allocation2 + $0x68] sm:$0xff] %v197
  %202 = vst [vmem:[#allocation2 + $0x70] sm:$0xff] %v198
  %203 = vst [vmem:[#allocation2 + $0x78] sm:$0xff] %v199
  %204 = vst [vmem:[#allocation2 + $0x80] sm:$0xff] %v23
  %205 = vst [vmem:[#allocation2 + $0x88] sm:$0xff] %v24
  %206 = vst [vmem:[#allocation2 + $0x90] sm:$0xff] %v25
  %207 = vst [vmem:[#allocation2 + $0x98] sm:$0xff] %v26
  %208 = vrot.lane.b32.xlu0 %v23, 127
  %v209 = vpop.permute.xlu0 %208
  %210 = vrot.lane.b32.xlu0 %v24, 127
  %v211 = vpop.permute.xlu0 %210
  %212 = vrot.lane.b32.xlu0 %v25, 127
  %v213 = vpop.permute.xlu0 %212
  %214 = vrot.lane.b32.xlu0 %v26, 127
  %v215 = vpop.permute.xlu0 %214
  %vm216 = vcmp.lt.s32.totalorder %v36, 127
  %v217 = vsel %vm216, %v213, %v215
  %v218 = vsel %vm216, %v211, %v213
  %v219 = vsel %vm216, %v209, %v211
  %v220 = vsel %vm216, %v215, %v209
  %s221 = scalar_lea.vmem %s1, 20
  %v222 = vld [vmem:[%s221] sm:$0xf]
  %v224 = vlaneseq
  %v225 = vshrl.u32 %v224, 7
  %v226 = vsub.s32 0, %v225
  %v227 = vrot.slane %v222, %v226
  %v228 = vlaneseq
  %v229 = vshrl.u32 %v228, 7
  %v230 = vsub.s32 1, %v229
  %v231 = vrot.slane %v222, %v230
  %v232 = vlaneseq
  %v233 = vshrl.u32 %v232, 7
  %v234 = vsub.s32 2, %v233
  %v235 = vrot.slane %v222, %v234
  %v236 = vlaneseq
  %v237 = vshrl.u32 %v236, 7
  %v238 = vsub.s32 3, %v237
  %v239 = vrot.slane %v222, %v238
  %v244 = vmul.f32 %v219, %v227
  %v245 = vmul.f32 %v218, %v231
  %v246 = vmul.f32 %v217, %v235
  %v247 = vmul.f32 %v220, %v239
  %248 = vst [vmem:[#allocation2 + $0xa0] sm:$0xff] %v244
  %249 = vst [vmem:[#allocation2 + $0xa8] sm:$0xff] %v245
  %250 = vst [vmem:[#allocation2 + $0xb0] sm:$0xff] %v246
  %251 = vst [vmem:[#allocation2 + $0xb8] sm:$0xff] %v247
  %252 = vrot.lane.b32.xlu0 %v23, 113
  %v253 = vpop.permute.xlu0 %252
  %254 = vrot.lane.b32.xlu0 %v24, 113
  %v255 = vpop.permute.xlu0 %254
  %256 = vrot.lane.b32.xlu0 %v25, 113
  %v257 = vpop.permute.xlu0 %256
  %258 = vrot.lane.b32.xlu0 %v26, 113
  %v259 = vpop.permute.xlu0 %258
  %vm260 = vcmp.lt.s32.totalorder %v36, 113
  %v261 = vsel %vm260, %v257, %v259
  %v262 = vsel %vm260, %v255, %v257
  %v263 = vsel %vm260, %v253, %v255
  %v264 = vsel %vm260, %v259, %v253
  %s265 = scalar_lea.vmem %s1, 24
  %v266 = vld [vmem:[%s265] sm:$0xf]
  %v268 = vlaneseq
  %v269 = vshrl.u32 %v268, 7
  %v270 = vsub.s32 0, %v269
  %v271 = vrot.slane %v266, %v270
  %v272 = vlaneseq
  %v273 = vshrl.u32 %v272, 7
  %v274 = vsub.s32 1, %v273
  %v275 = vrot.slane %v266, %v274
  %v276 = vlaneseq
  %v277 = vshrl.u32 %v276, 7
  %v278 = vsub.s32 2, %v277
  %v279 = vrot.slane %v266, %v278
  %v280 = vlaneseq
  %v281 = vshrl.u32 %v280, 7
  %v282 = vsub.s32 3, %v281
  %v283 = vrot.slane %v266, %v282
  %v288 = vmul.f32 %v263, %v271
  %v289 = vmul.f32 %v262, %v275
  %v290 = vmul.f32 %v261, %v279
  %v291 = vmul.f32 %v264, %v283
  %292 = vst [vmem:[#allocation2 + $0xc0] sm:$0xff] %v288
  %293 = vst [vmem:[#allocation2 + $0xc8] sm:$0xff] %v289
  %294 = vst [vmem:[#allocation2 + $0xd0] sm:$0xff] %v290
  %295 = vst [vmem:[#allocation2 + $0xd8] sm:$0xff] %v291
  %296 = vrot.lane.b32.xlu0 %v23, 112
  %v297 = vpop.permute.xlu0 %296
  %298 = vrot.lane.b32.xlu0 %v24, 112
  %v299 = vpop.permute.xlu0 %298
  %300 = vrot.lane.b32.xlu0 %v25, 112
  %v301 = vpop.permute.xlu0 %300
  %302 = vrot.lane.b32.xlu0 %v26, 112
  %v303 = vpop.permute.xlu0 %302
  %vm304 = vcmp.lt.s32.totalorder %v36, 112
  %v305 = vsel %vm304, %v301, %v303
  %v306 = vsel %vm304, %v299, %v301
  %v307 = vsel %vm304, %v297, %v299
  %v308 = vsel %vm304, %v303, %v297
  %s309 = scalar_lea.vmem %s1, 28
  %v310 = vld [vmem:[%s309] sm:$0xf]
  %v312 = vlaneseq
  %v313 = vshrl.u32 %v312, 7
  %v314 = vsub.s32 0, %v313
  %v315 = vrot.slane %v310, %v314
  %v316 = vlaneseq
  %v317 = vshrl.u32 %v316, 7
  %v318 = vsub.s32 1, %v317
  %v319 = vrot.slane %v310, %v318
  %v320 = vlaneseq
  %v321 = vshrl.u32 %v320, 7
  %v322 = vsub.s32 2, %v321
  %v323 = vrot.slane %v310, %v322
  %v324 = vlaneseq
  %v325 = vshrl.u32 %v324, 7
  %v326 = vsub.s32 3, %v325
  %v327 = vrot.slane %v310, %v326
  %v332 = vmul.f32 %v307, %v315
  %v333 = vmul.f32 %v306, %v319
  %v334 = vmul.f32 %v305, %v323
  %v335 = vmul.f32 %v308, %v327
  %336 = vst [vmem:[#allocation2 + $0xe0] sm:$0xff] %v332
  %337 = vst [vmem:[#allocation2 + $0xe8] sm:$0xff] %v333
  %338 = vst [vmem:[#allocation2 + $0xf0] sm:$0xff] %v334
  %339 = vst [vmem:[#allocation2 + $0xf8] sm:$0xff] %v335
  %340 = vrot.lane.b32.xlu0 %v23, 111
  %v341 = vpop.permute.xlu0 %340
  %342 = vrot.lane.b32.xlu0 %v24, 111
  %v343 = vpop.permute.xlu0 %342
  %344 = vrot.lane.b32.xlu0 %v25, 111
  %v345 = vpop.permute.xlu0 %344
  %346 = vrot.lane.b32.xlu0 %v26, 111
  %v347 = vpop.permute.xlu0 %346
  %vm348 = vcmp.lt.s32.totalorder %v36, 111
  %v349 = vsel %vm348, %v345, %v347
  %v350 = vsel %vm348, %v343, %v345
  %v351 = vsel %vm348, %v341, %v343
  %v352 = vsel %vm348, %v347, %v341
  %s353 = scalar_lea.vmem %s1, 32
  %v354 = vld [vmem:[%s353] sm:$0xf]
  %v356 = vlaneseq
  %v357 = vshrl.u32 %v356, 7
  %v358 = vsub.s32 0, %v357
  %v359 = vrot.slane %v354, %v358
  %v360 = vlaneseq
  %v361 = vshrl.u32 %v360, 7
  %v362 = vsub.s32 1, %v361
  %v363 = vrot.slane %v354, %v362
  %v364 = vlaneseq
  %v365 = vshrl.u32 %v364, 7
  %v366 = vsub.s32 2, %v365
  %v367 = vrot.slane %v354, %v366
  %v368 = vlaneseq
  %v369 = vshrl.u32 %v368, 7
  %v370 = vsub.s32 3, %v369
  %v371 = vrot.slane %v354, %v370
  %v376 = vmul.f32 %v351, %v359
  %v377 = vmul.f32 %v350, %v363
  %v378 = vmul.f32 %v349, %v367
  %v379 = vmul.f32 %v352, %v371
  %380 = vst [vmem:[#allocation2 + $0x100] sm:$0xff] %v376
  %381 = vst [vmem:[#allocation2 + $0x108] sm:$0xff] %v377
  %382 = vst [vmem:[#allocation2 + $0x110] sm:$0xff] %v378
  %383 = vst [vmem:[#allocation2 + $0x118] sm:$0xff] %v379
  %v384 = vld [vmem:[%s2] sm:$0xff]
  %v385 = vld [vmem:[#allocation2] sm:$0xff]
  %v386 = vld [vmem:[#allocation2 + $0x8] sm:$0xff]
  %v387 = vld [vmem:[#allocation2 + $0x10] sm:$0xff]
  %v388 = vld [vmem:[#allocation2 + $0x18] sm:$0xff]
  %v389 = vld [vmem:[#allocation2 + $0x20] sm:$0xff]
  %v390 = vld [vmem:[#allocation2 + $0x28] sm:$0xff]
  %v391 = vld [vmem:[#allocation2 + $0x30] sm:$0xff]
  %v392 = vld [vmem:[#allocation2 + $0x38] sm:$0xff]
  %v393 = vld [vmem:[#allocation2 + $0x40] sm:$0xff]
  %v394 = vld [vmem:[#allocation2 + $0x48] sm:$0xff]
  %v395 = vld [vmem:[#allocation2 + $0x50] sm:$0xff]
  %v396 = vld [vmem:[#allocation2 + $0x58] sm:$0xff]
  %v397 = vld [vmem:[#allocation2 + $0x60] sm:$0xff]
  %v398 = vld [vmem:[#allocation2 + $0x68] sm:$0xff]
  %v399 = vld [vmem:[#allocation2 + $0x70] sm:$0xff]
  %v400 = vld [vmem:[#allocation2 + $0x78] sm:$0xff]
  %v401 = vld [vmem:[#allocation2 + $0x80] sm:$0xff]
  %v402 = vld [vmem:[#allocation2 + $0x88] sm:$0xff]
  %v403 = vld [vmem:[#allocation2 + $0x90] sm:$0xff]
  %v404 = vld [vmem:[#allocation2 + $0x98] sm:$0xff]
  %v405 = vld [vmem:[#allocation2 + $0xa0] sm:$0xff]
  %v406 = vld [vmem:[#allocation2 + $0xa8] sm:$0xff]
  %v407 = vld [vmem:[#allocation2 + $0xb0] sm:$0xff]
  %v408 = vld [vmem:[#allocation2 + $0xb8] sm:$0xff]
  %v409 = vld [vmem:[#allocation2 + $0xc0] sm:$0xff]
  %v410 = vld [vmem:[#allocation2 + $0xc8] sm:$0xff]
  %v411 = vld [vmem:[#allocation2 + $0xd0] sm:$0xff]
  %v412 = vld [vmem:[#allocation2 + $0xd8] sm:$0xff]
  %v413 = vld [vmem:[#allocation2 + $0xe0] sm:$0xff]
  %v414 = vld [vmem:[#allocation2 + $0xe8] sm:$0xff]
  %v415 = vld [vmem:[#allocation2 + $0xf0] sm:$0xff]
  %v416 = vld [vmem:[#allocation2 + $0xf8] sm:$0xff]
  %v417 = vld [vmem:[#allocation2 + $0x100] sm:$0xff]
  %v418 = vld [vmem:[#allocation2 + $0x108] sm:$0xff]
  %v419 = vld [vmem:[#allocation2 + $0x110] sm:$0xff]
  %v420 = vld [vmem:[#allocation2 + $0x118] sm:$0xff]
  %v421 = vld [vmem:[%s4] sm:$0xff]
  %423 = vset.pattern.permute.xlu0 0
  %424 = vperm.xlu0 %423, %v421
  %v425 = vpop.permute.xlu0 %424
  %vm427 = vcmask 588800
  %v429 = vsel %vm427, %v384, 0
  %431 = vmatprep.subr.mxu0 0.0
  %432 = vmatpush1.msra.mxu0 0.0
  %433 = vmatprep.subr.mxu0 0.0
  %434 = vmatpush1.msra.mxu0 0.0
  %435 = vmatprep.subr.mxu0 0.0
  %436 = vmatpush1.msra.mxu0 0.0
  %437 = vmatprep.subr.mxu0 0.0
  %438 = vmatpush1.msra.mxu0 0.0
  %439 = vmatprep.subr.mxu0 0.0
  %440 = vmatpush1.msra.mxu0 0.0
  %441 = vmatprep.subr.mxu0 0.0
  %442 = vmatpush1.msra.mxu0 0.0
  %443 = vmatprep.subr.mxu0 0.0
  %444 = vmatpush1.msra.mxu0 0.0
  %445 = vmatprep.subr.mxu0 %v418
  %446 = vmatpush1.msra.mxu0 %v417
  %447 = vmatprep.subr.mxu0 %v414
  %448 = vmatpush1.msra.mxu0 %v413
  %449 = vmatprep.subr.mxu0 %v410
  %450 = vmatpush1.msra.mxu0 %v409
  %451 = vmatprep.subr.mxu0 %v406
  %452 = vmatpush1.msra.mxu0 %v405
  %453 = vmatprep.subr.mxu0 %v402
  %454 = vmatpush1.msra.mxu0 %v401
  %455 = vmatprep.subr.mxu0 %v398
  %456 = vmatpush1.msra.mxu0 %v397
  %457 = vmatprep.subr.mxu0 %v394
  %458 = vmatpush1.msra.mxu0 %v393
  %459 = vmatprep.subr.mxu0 %v390
  %460 = vmatpush1.msra.mxu0 %v389
  %461 = vmatprep.subr.mxu0 %v386
  %462 = vmatpush1.msra.mxu0 %v385
  %463 = vmatprep.subr.mxu0 0.0
  %464 = vmatpush2.msra.mxu0 0.0
  %465 = vmatprep.subr.mxu0 0.0
  %466 = vmatpush2.msra.mxu0 0.0
  %467 = vmatprep.subr.mxu0 0.0
  %468 = vmatpush2.msra.mxu0 0.0
  %469 = vmatprep.subr.mxu0 0.0
  %470 = vmatpush2.msra.mxu0 0.0
  %471 = vmatprep.subr.mxu0 0.0
  %472 = vmatpush2.msra.mxu0 0.0
  %473 = vmatprep.subr.mxu0 0.0
  %474 = vmatpush2.msra.mxu0 0.0
  %475 = vmatprep.subr.mxu0 0.0
  %476 = vmatpush2.msra.mxu0 0.0
  %477 = vmatprep.subr.mxu0 0.0
  %478 = vmatpush2.msra.mxu0 0.0
  %479 = vmatprep.subr.mxu0 0.0
  %480 = vmatpush2.msra.mxu0 0.0
  %481 = vmatprep.subr.mxu0 0.0
  %482 = vmatpush2.msra.mxu0 0.0
  %483 = vmatprep.subr.mxu0 0.0
  %484 = vmatpush2.msra.mxu0 0.0
  %485 = vmatprep.subr.mxu0 0.0
  %486 = vmatpush2.msra.mxu0 0.0
  %487 = vmatprep.subr.mxu0 0.0
  %488 = vmatpush2.msra.mxu0 0.0
  %489 = vmatprep.subr.mxu0 0.0
  %490 = vmatpush2.msra.mxu0 0.0
  %491 = vmatprep.subr.mxu0 0.0
  %492 = vmatpush2.msra.mxu0 0.0
  %493 = vmatprep.subr.mxu0 0.0
  %494 = vmatpush2.msra.mxu0 0.0
  %495 = vmatprep.mubr.f32.mxu0 0.0
  %496 = vmatmul.mubr.f32.gmra.mxu0 %v429
  %v497 = vpop.f32.mrf.mxu0
  %v498 = vadd.f32 %v425, %v497
  %v499 = vpop.f32.mrf.mxu0
  %v500 = vadd.f32 %v425, %v499
  %501 = vdwg.mxu0
  %502 = vmatprep.subr.mxu0 0.0
  %503 = vmatpush1.msra.mxu0 0.0
  %504 = vmatprep.subr.mxu0 0.0
  %505 = vmatpush1.msra.mxu0 0.0
  %506 = vmatprep.subr.mxu0 0.0
  %507 = vmatpush1.msra.mxu0 0.0
  %508 = vmatprep.subr.mxu0 0.0
  %509 = vmatpush1.msra.mxu0 0.0
  %510 = vmatprep.subr.mxu0 0.0
  %511 = vmatpush1.msra.mxu0 0.0
  %512 = vmatprep.subr.mxu0 0.0
  %513 = vmatpush1.msra.mxu0 0.0
  %514 = vmatprep.subr.mxu0 0.0
  %515 = vmatpush1.msra.mxu0 0.0
  %516 = vmatprep.subr.mxu0 %v420
  %517 = vmatpush1.msra.mxu0 %v419
  %518 = vmatprep.subr.mxu0 %v416
  %519 = vmatpush1.msra.mxu0 %v415
  %520 = vmatprep.subr.mxu0 %v412
  %521 = vmatpush1.msra.mxu0 %v411
  %522 = vmatprep.subr.mxu0 %v408
  %523 = vmatpush1.msra.mxu0 %v407
  %524 = vmatprep.subr.mxu0 %v404
  %525 = vmatpush1.msra.mxu0 %v403
  %526 = vmatprep.subr.mxu0 %v400
  %527 = vmatpush1.msra.mxu0 %v399
  %528 = vmatprep.subr.mxu0 %v396
  %529 = vmatpush1.msra.mxu0 %v395
  %530 = vmatprep.subr.mxu0 %v392
  %531 = vmatpush1.msra.mxu0 %v391
  %532 = vmatprep.subr.mxu0 %v388
  %533 = vmatpush1.msra.mxu0 %v387
  %534 = vmatprep.subr.mxu0 0.0
  %535 = vmatpush2.msra.mxu0 0.0
  %536 = vmatprep.subr.mxu0 0.0
  %537 = vmatpush2.msra.mxu0 0.0
  %538 = vmatprep.subr.mxu0 0.0
  %539 = vmatpush2.msra.mxu0 0.0
  %540 = vmatprep.subr.mxu0 0.0
  %541 = vmatpush2.msra.mxu0 0.0
  %542 = vmatprep.subr.mxu0 0.0
  %543 = vmatpush2.msra.mxu0 0.0
  %544 = vmatprep.subr.mxu0 0.0
  %545 = vmatpush2.msra.mxu0 0.0
  %546 = vmatprep.subr.mxu0 0.0
  %547 = vmatpush2.msra.mxu0 0.0
  %548 = vmatprep.subr.mxu0 0.0
  %549 = vmatpush2.msra.mxu0 0.0
  %550 = vmatprep.subr.mxu0 0.0
  %551 = vmatpush2.msra.mxu0 0.0
  %552 = vmatprep.subr.mxu0 0.0
  %553 = vmatpush2.msra.mxu0 0.0
  %554 = vmatprep.subr.mxu0 0.0
  %555 = vmatpush2.msra.mxu0 0.0
  %556 = vmatprep.subr.mxu0 0.0
  %557 = vmatpush2.msra.mxu0 0.0
  %558 = vmatprep.subr.mxu0 0.0
  %559 = vmatpush2.msra.mxu0 0.0
  %560 = vmatprep.subr.mxu0 0.0
  %561 = vmatpush2.msra.mxu0 0.0
  %562 = vmatprep.subr.mxu0 0.0
  %563 = vmatpush2.msra.mxu0 0.0
  %564 = vmatprep.subr.mxu0 0.0
  %565 = vmatpush2.msra.mxu0 0.0
  %566 = vmatprep.mubr.f32.mxu0 0.0
  %567 = vmatmul.mubr.f32.gmra.mxu0 %v429
  %v568 = vpop.f32.mrf.mxu0
  %v569 = vadd.f32 %v425, %v568
  %v570 = vpop.f32.mrf.mxu0
  %v571 = vadd.f32 %v425, %v570
  %572 = vdwg.mxu0
  %v573 = vmax.f32 %v498, 0.0
  %v574 = vmax.f32 %v500, 0.0
  %v575 = vmax.f32 %v569, 0.0
  %v576 = vmax.f32 %v571, 0.0
  %577 = vrot.lane.b32.xlu0 %v573, 17
  %v578 = vpop.permute.xlu0 %577
  %579 = vrot.lane.b32.xlu0 %v574, 17
  %v580 = vpop.permute.xlu0 %579
  %581 = vrot.lane.b32.xlu0 %v575, 17
  %v582 = vpop.permute.xlu0 %581
  %583 = vrot.lane.b32.xlu0 %v576, 17
  %v584 = vpop.permute.xlu0 %583
  %v585 = vsel %vm37, %v582, %v584
  %v586 = vsel %vm37, %v580, %v582
  %v587 = vsel %vm37, %v578, %v580
  %v588 = vsel %vm37, %v584, %v578
  %v589 = vld [vmem:[%s1] sm:$0xf]
  %v591 = vlaneseq
  %v592 = vshrl.u32 %v591, 7
  %v593 = vsub.s32 0, %v592
  %v594 = vrot.slane %v589, %v593
  %v595 = vlaneseq
  %v596 = vshrl.u32 %v595, 7
  %v597 = vsub.s32 1, %v596
  %v598 = vrot.slane %v589, %v597
  %v599 = vlaneseq
  %v600 = vshrl.u32 %v599, 7
  %v601 = vsub.s32 2, %v600
  %v602 = vrot.slane %v589, %v601
  %v603 = vlaneseq
  %v604 = vshrl.u32 %v603, 7
  %v605 = vsub.s32 3, %v604
  %v606 = vrot.slane %v589, %v605
  %v611 = vmul.f32 %v588, %v594
  %v612 = vmul.f32 %v587, %v598
  %v613 = vmul.f32 %v586, %v602
  %v614 = vmul.f32 %v585, %v606
  %615 = vst [vmem:[#allocation2] sm:$0xff] %v611
  %616 = vst [vmem:[#allocation2 + $0x8] sm:$0xff] %v612
  %617 = vst [vmem:[#allocation2 + $0x10] sm:$0xff] %v613
  %618 = vst [vmem:[#allocation2 + $0x18] sm:$0xff] %v614
  %619 = vrot.lane.b32.xlu0 %v573, 16
  %v620 = vpop.permute.xlu0 %619
  %621 = vrot.lane.b32.xlu0 %v574, 16
  %v622 = vpop.permute.xlu0 %621
  %623 = vrot.lane.b32.xlu0 %v575, 16
  %v624 = vpop.permute.xlu0 %623
  %625 = vrot.lane.b32.xlu0 %v576, 16
  %v626 = vpop.permute.xlu0 %625
  %v627 = vsel %vm80, %v624, %v626
  %v628 = vsel %vm80, %v622, %v624
  %v629 = vsel %vm80, %v620, %v622
  %v630 = vsel %vm80, %v626, %v620
  %v631 = vld [vmem:[%s85] sm:$0xf]
  %v633 = vlaneseq
  %v634 = vshrl.u32 %v633, 7
  %v635 = vsub.s32 0, %v634
  %v636 = vrot.slane %v631, %v635
  %v637 = vlaneseq
  %v638 = vshrl.u32 %v637, 7
  %v639 = vsub.s32 1, %v638
  %v640 = vrot.slane %v631, %v639
  %v641 = vlaneseq
  %v642 = vshrl.u32 %v641, 7
  %v643 = vsub.s32 2, %v642
  %v644 = vrot.slane %v631, %v643
  %v645 = vlaneseq
  %v646 = vshrl.u32 %v645, 7
  %v647 = vsub.s32 3, %v646
  %v648 = vrot.slane %v631, %v647
  %v653 = vmul.f32 %v630, %v636
  %v654 = vmul.f32 %v629, %v640
  %v655 = vmul.f32 %v628, %v644
  %v656 = vmul.f32 %v627, %v648
  %657 = vst [vmem:[#allocation2 + $0x20] sm:$0xff] %v653
  %658 = vst [vmem:[#allocation2 + $0x28] sm:$0xff] %v654
  %659 = vst [vmem:[#allocation2 + $0x30] sm:$0xff] %v655
  %660 = vst [vmem:[#allocation2 + $0x38] sm:$0xff] %v656
  %661 = vrot.lane.b32.xlu0 %v573, 15
  %v662 = vpop.permute.xlu0 %661
  %663 = vrot.lane.b32.xlu0 %v574, 15
  %v664 = vpop.permute.xlu0 %663
  %665 = vrot.lane.b32.xlu0 %v575, 15
  %v666 = vpop.permute.xlu0 %665
  %667 = vrot.lane.b32.xlu0 %v576, 15
  %v668 = vpop.permute.xlu0 %667
  %v669 = vsel %vm124, %v666, %v668
  %v670 = vsel %vm124, %v664, %v666
  %v671 = vsel %vm124, %v662, %v664
  %v672 = vsel %vm124, %v668, %v662
  %v673 = vld [vmem:[%s129] sm:$0xf]
  %v675 = vlaneseq
  %v676 = vshrl.u32 %v675, 7
  %v677 = vsub.s32 0, %v676
  %v678 = vrot.slane %v673, %v677
  %v679 = vlaneseq
  %v680 = vshrl.u32 %v679, 7
  %v681 = vsub.s32 1, %v680
  %v682 = vrot.slane %v673, %v681
  %v683 = vlaneseq
  %v684 = vshrl.u32 %v683, 7
  %v685 = vsub.s32 2, %v684
  %v686 = vrot.slane %v673, %v685
  %v687 = vlaneseq
  %v688 = vshrl.u32 %v687, 7
  %v689 = vsub.s32 3, %v688
  %v690 = vrot.slane %v673, %v689
  %v695 = vmul.f32 %v672, %v678
  %v696 = vmul.f32 %v671, %v682
  %v697 = vmul.f32 %v670, %v686
  %v698 = vmul.f32 %v669, %v690
  %699 = vst [vmem:[#allocation2 + $0x40] sm:$0xff] %v695
  %700 = vst [vmem:[#allocation2 + $0x48] sm:$0xff] %v696
  %701 = vst [vmem:[#allocation2 + $0x50] sm:$0xff] %v697
  %702 = vst [vmem:[#allocation2 + $0x58] sm:$0xff] %v698
  %703 = vrot.lane.b32.xlu0 %v573, 1
  %v704 = vpop.permute.xlu0 %703
  %705 = vrot.lane.b32.xlu0 %v574, 1
  %v706 = vpop.permute.xlu0 %705
  %707 = vrot.lane.b32.xlu0 %v575, 1
  %v708 = vpop.permute.xlu0 %707
  %709 = vrot.lane.b32.xlu0 %v576, 1
  %v710 = vpop.permute.xlu0 %709
  %v711 = vsel %vm168, %v708, %v710
  %v712 = vsel %vm168, %v706, %v708
  %v713 = vsel %vm168, %v704, %v706
  %v714 = vsel %vm168, %v710, %v704
  %v715 = vld [vmem:[%s173] sm:$0xf]
  %v717 = vlaneseq
  %v718 = vshrl.u32 %v717, 7
  %v719 = vsub.s32 0, %v718
  %v720 = vrot.slane %v715, %v719
  %v721 = vlaneseq
  %v722 = vshrl.u32 %v721, 7
  %v723 = vsub.s32 1, %v722
  %v724 = vrot.slane %v715, %v723
  %v725 = vlaneseq
  %v726 = vshrl.u32 %v725, 7
  %v727 = vsub.s32 2, %v726
  %v728 = vrot.slane %v715, %v727
  %v729 = vlaneseq
  %v730 = vshrl.u32 %v729, 7
  %v731 = vsub.s32 3, %v730
  %v732 = vrot.slane %v715, %v731
  %v737 = vmul.f32 %v714, %v720
  %v738 = vmul.f32 %v713, %v724
  %v739 = vmul.f32 %v712, %v728
  %v740 = vmul.f32 %v711, %v732
  %741 = vst [vmem:[#allocation2 + $0x60] sm:$0xff] %v737
  %742 = vst [vmem:[#allocation2 + $0x68] sm:$0xff] %v738
  %743 = vst [vmem:[#allocation2 + $0x70] sm:$0xff] %v739
  %744 = vst [vmem:[#allocation2 + $0x78] sm:$0xff] %v740
  %745 = vst [vmem:[#allocation2 + $0x80] sm:$0xff] %v573
  %746 = vst [vmem:[#allocation2 + $0x88] sm:$0xff] %v574
  %747 = vst [vmem:[#allocation2 + $0x90] sm:$0xff] %v575
  %748 = vst [vmem:[#allocation2 + $0x98] sm:$0xff] %v576
  %749 = vrot.lane.b32.xlu0 %v573, 127
  %v750 = vpop.permute.xlu0 %749
  %751 = vrot.lane.b32.xlu0 %v574, 127
  %v752 = vpop.permute.xlu0 %751
  %753 = vrot.lane.b32.xlu0 %v575, 127
  %v754 = vpop.permute.xlu0 %753
  %755 = vrot.lane.b32.xlu0 %v576, 127
  %v756 = vpop.permute.xlu0 %755
  %v757 = vsel %vm216, %v754, %v756
  %v758 = vsel %vm216, %v752, %v754
  %v759 = vsel %vm216, %v750, %v752
  %v760 = vsel %vm216, %v756, %v750
  %v761 = vld [vmem:[%s221] sm:$0xf]
  %v763 = vlaneseq
  %v764 = vshrl.u32 %v763, 7
  %v765 = vsub.s32 0, %v764
  %v766 = vrot.slane %v761, %v765
  %v767 = vlaneseq
  %v768 = vshrl.u32 %v767, 7
  %v769 = vsub.s32 1, %v768
  %v770 = vrot.slane %v761, %v769
  %v771 = vlaneseq
  %v772 = vshrl.u32 %v771, 7
  %v773 = vsub.s32 2, %v772
  %v774 = vrot.slane %v761, %v773
  %v775 = vlaneseq
  %v776 = vshrl.u32 %v775, 7
  %v777 = vsub.s32 3, %v776
  %v778 = vrot.slane %v761, %v777
  %v783 = vmul.f32 %v759, %v766
  %v784 = vmul.f32 %v758, %v770
  %v785 = vmul.f32 %v757, %v774
  %v786 = vmul.f32 %v760, %v778
  %787 = vst [vmem:[#allocation2 + $0xa0] sm:$0xff] %v783
  %788 = vst [vmem:[#allocation2 + $0xa8] sm:$0xff] %v784
  %789 = vst [vmem:[#allocation2 + $0xb0] sm:$0xff] %v785
  %790 = vst [vmem:[#allocation2 + $0xb8] sm:$0xff] %v786
  %791 = vrot.lane.b32.xlu0 %v573, 113
  %v792 = vpop.permute.xlu0 %791
  %793 = vrot.lane.b32.xlu0 %v574, 113
  %v794 = vpop.permute.xlu0 %793
  %795 = vrot.lane.b32.xlu0 %v575, 113
  %v796 = vpop.permute.xlu0 %795
  %797 = vrot.lane.b32.xlu0 %v576, 113
  %v798 = vpop.permute.xlu0 %797
  %v799 = vsel %vm260, %v796, %v798
  %v800 = vsel %vm260, %v794, %v796
  %v801 = vsel %vm260, %v792, %v794
  %v802 = vsel %vm260, %v798, %v792
  %v803 = vld [vmem:[%s265] sm:$0xf]
  %v805 = vlaneseq
  %v806 = vshrl.u32 %v805, 7
  %v807 = vsub.s32 0, %v806
  %v808 = vrot.slane %v803, %v807
  %v809 = vlaneseq
  %v810 = vshrl.u32 %v809, 7
  %v811 = vsub.s32 1, %v810
  %v812 = vrot.slane %v803, %v811
  %v813 = vlaneseq
  %v814 = vshrl.u32 %v813, 7
  %v815 = vsub.s32 2, %v814
  %v816 = vrot.slane %v803, %v815
  %v817 = vlaneseq
  %v818 = vshrl.u32 %v817, 7
  %v819 = vsub.s32 3, %v818
  %v820 = vrot.slane %v803, %v819
  %v825 = vmul.f32 %v801, %v808
  %v826 = vmul.f32 %v800, %v812
  %v827 = vmul.f32 %v799, %v816
  %v828 = vmul.f32 %v802, %v820
  %829 = vst [vmem:[#allocation2 + $0xc0] sm:$0xff] %v825
  %830 = vst [vmem:[#allocation2 + $0xc8] sm:$0xff] %v826
  %831 = vst [vmem:[#allocation2 + $0xd0] sm:$0xff] %v827
  %832 = vst [vmem:[#allocation2 + $0xd8] sm:$0xff] %v828
  %833 = vrot.lane.b32.xlu0 %v573, 112
  %v834 = vpop.permute.xlu0 %833
  %835 = vrot.lane.b32.xlu0 %v574, 112
  %v836 = vpop.permute.xlu0 %835
  %837 = vrot.lane.b32.xlu0 %v575, 112
  %v838 = vpop.permute.xlu0 %837
  %839 = vrot.lane.b32.xlu0 %v576, 112
  %v840 = vpop.permute.xlu0 %839
  %v841 = vsel %vm304, %v838, %v840
  %v842 = vsel %vm304, %v836, %v838
  %v843 = vsel %vm304, %v834, %v836
  %v844 = vsel %vm304, %v840, %v834
  %v845 = vld [vmem:[%s309] sm:$0xf]
  %v847 = vlaneseq
  %v848 = vshrl.u32 %v847, 7
  %v849 = vsub.s32 0, %v848
  %v850 = vrot.slane %v845, %v849
  %v851 = vlaneseq
  %v852 = vshrl.u32 %v851, 7
  %v853 = vsub.s32 1, %v852
  %v854 = vrot.slane %v845, %v853
  %v855 = vlaneseq
  %v856 = vshrl.u32 %v855, 7
  %v857 = vsub.s32 2, %v856
  %v858 = vrot.slane %v845, %v857
  %v859 = vlaneseq
  %v860 = vshrl.u32 %v859, 7
  %v861 = vsub.s32 3, %v860
  %v862 = vrot.slane %v845, %v861
  %v867 = vmul.f32 %v843, %v850
  %v868 = vmul.f32 %v842, %v854
  %v869 = vmul.f32 %v841, %v858
  %v870 = vmul.f32 %v844, %v862
  %871 = vst [vmem:[#allocation2 + $0xe0] sm:$0xff] %v867
  %872 = vst [vmem:[#allocation2 + $0xe8] sm:$0xff] %v868
  %873 = vst [vmem:[#allocation2 + $0xf0] sm:$0xff] %v869
  %874 = vst [vmem:[#allocation2 + $0xf8] sm:$0xff] %v870
  %875 = vrot.lane.b32.xlu0 %v573, 111
  %v876 = vpop.permute.xlu0 %875
  %877 = vrot.lane.b32.xlu0 %v574, 111
  %v878 = vpop.permute.xlu0 %877
  %879 = vrot.lane.b32.xlu0 %v575, 111
  %v880 = vpop.permute.xlu0 %879
  %881 = vrot.lane.b32.xlu0 %v576, 111
  %v882 = vpop.permute.xlu0 %881
  %v883 = vsel %vm348, %v880, %v882
  %v884 = vsel %vm348, %v878, %v880
  %v885 = vsel %vm348, %v876, %v878
  %v886 = vsel %vm348, %v882, %v876
  %v887 = vld [vmem:[%s353] sm:$0xf]
  %v889 = vlaneseq
  %v890 = vshrl.u32 %v889, 7
  %v891 = vsub.s32 0, %v890
  %v892 = vrot.slane %v887, %v891
  %v893 = vlaneseq
  %v894 = vshrl.u32 %v893, 7
  %v895 = vsub.s32 1, %v894
  %v896 = vrot.slane %v887, %v895
  %v897 = vlaneseq
  %v898 = vshrl.u32 %v897, 7
  %v899 = vsub.s32 2, %v898
  %v900 = vrot.slane %v887, %v899
  %v901 = vlaneseq
  %v902 = vshrl.u32 %v901, 7
  %v903 = vsub.s32 3, %v902
  %v904 = vrot.slane %v887, %v903
  %v909 = vmul.f32 %v885, %v892
  %v910 = vmul.f32 %v884, %v896
  %v911 = vmul.f32 %v883, %v900
  %v912 = vmul.f32 %v886, %v904
  %913 = vst [vmem:[#allocation2 + $0x100] sm:$0xff] %v909
  %914 = vst [vmem:[#allocation2 + $0x108] sm:$0xff] %v910
  %915 = vst [vmem:[#allocation2 + $0x110] sm:$0xff] %v911
  %916 = vst [vmem:[#allocation2 + $0x118] sm:$0xff] %v912
  %v917 = vld [vmem:[%s3] sm:$0xff]
  %v918 = vld [vmem:[#allocation2] sm:$0xff]
  %v919 = vld [vmem:[#allocation2 + $0x8] sm:$0xff]
  %v920 = vld [vmem:[#allocation2 + $0x10] sm:$0xff]
  %v921 = vld [vmem:[#allocation2 + $0x18] sm:$0xff]
  %v922 = vld [vmem:[#allocation2 + $0x20] sm:$0xff]
  %v923 = vld [vmem:[#allocation2 + $0x28] sm:$0xff]
  %v924 = vld [vmem:[#allocation2 + $0x30] sm:$0xff]
  %v925 = vld [vmem:[#allocation2 + $0x38] sm:$0xff]
  %v926 = vld [vmem:[#allocation2 + $0x40] sm:$0xff]
  %v927 = vld [vmem:[#allocation2 + $0x48] sm:$0xff]
  %v928 = vld [vmem:[#allocation2 + $0x50] sm:$0xff]
  %v929 = vld [vmem:[#allocation2 + $0x58] sm:$0xff]
  %v930 = vld [vmem:[#allocation2 + $0x60] sm:$0xff]
  %v931 = vld [vmem:[#allocation2 + $0x68] sm:$0xff]
  %v932 = vld [vmem:[#allocation2 + $0x70] sm:$0xff]
  %v933 = vld [vmem:[#allocation2 + $0x78] sm:$0xff]
  %v934 = vld [vmem:[#allocation2 + $0x80] sm:$0xff]
  %v935 = vld [vmem:[#allocation2 + $0x88] sm:$0xff]
  %v936 = vld [vmem:[#allocation2 + $0x90] sm:$0xff]
  %v937 = vld [vmem:[#allocation2 + $0x98] sm:$0xff]
  %v938 = vld [vmem:[#allocation2 + $0xa0] sm:$0xff]
  %v939 = vld [vmem:[#allocation2 + $0xa8] sm:$0xff]
  %v940 = vld [vmem:[#allocation2 + $0xb0] sm:$0xff]
  %v941 = vld [vmem:[#allocation2 + $0xb8] sm:$0xff]
  %v942 = vld [vmem:[#allocation2 + $0xc0] sm:$0xff]
  %v943 = vld [vmem:[#allocation2 + $0xc8] sm:$0xff]
  %v944 = vld [vmem:[#allocation2 + $0xd0] sm:$0xff]
  %v945 = vld [vmem:[#allocation2 + $0xd8] sm:$0xff]
  %v946 = vld [vmem:[#allocation2 + $0xe0] sm:$0xff]
  %v947 = vld [vmem:[#allocation2 + $0xe8] sm:$0xff]
  %v948 = vld [vmem:[#allocation2 + $0xf0] sm:$0xff]
  %v949 = vld [vmem:[#allocation2 + $0xf8] sm:$0xff]
  %v950 = vld [vmem:[#allocation2 + $0x100] sm:$0xff]
  %v951 = vld [vmem:[#allocation2 + $0x108] sm:$0xff]
  %v952 = vld [vmem:[#allocation2 + $0x110] sm:$0xff]
  %v953 = vld [vmem:[#allocation2 + $0x118] sm:$0xff]
  %v954 = vld [vmem:[%s5] sm:$0xff]
  %956 = vset.pattern.permute.xlu0 0
  %957 = vperm.xlu0 %956, %v954
  %v958 = vpop.permute.xlu0 %957
  %v961 = vsel %vm427, %v917, 0
  %963 = vmatprep.subr.mxu0 0.0
  %964 = vmatpush1.msra.mxu0 0.0
  %965 = vmatprep.subr.mxu0 0.0
  %966 = vmatpush1.msra.mxu0 0.0
  %967 = vmatprep.subr.mxu0 0.0
  %968 = vmatpush1.msra.mxu0 0.0
  %969 = vmatprep.subr.mxu0 0.0
  %970 = vmatpush1.msra.mxu0 0.0
  %971 = vmatprep.subr.mxu0 0.0
  %972 = vmatpush1.msra.mxu0 0.0
  %973 = vmatprep.subr.mxu0 0.0
  %974 = vmatpush1.msra.mxu0 0.0
  %975 = vmatprep.subr.mxu0 0.0
  %976 = vmatpush1.msra.mxu0 0.0
  %977 = vmatprep.subr.mxu0 %v951
  %978 = vmatpush1.msra.mxu0 %v950
  %979 = vmatprep.subr.mxu0 %v947
  %980 = vmatpush1.msra.mxu0 %v946
  %981 = vmatprep.subr.mxu0 %v943
  %982 = vmatpush1.msra.mxu0 %v942
  %983 = vmatprep.subr.mxu0 %v939
  %984 = vmatpush1.msra.mxu0 %v938
  %985 = vmatprep.subr.mxu0 %v935
  %986 = vmatpush1.msra.mxu0 %v934
  %987 = vmatprep.subr.mxu0 %v931
  %988 = vmatpush1.msra.mxu0 %v930
  %989 = vmatprep.subr.mxu0 %v927
  %990 = vmatpush1.msra.mxu0 %v926
  %991 = vmatprep.subr.mxu0 %v923
  %992 = vmatpush1.msra.mxu0 %v922
  %993 = vmatprep.subr.mxu0 %v919
  %994 = vmatpush1.msra.mxu0 %v918
  %995 = vmatprep.subr.mxu0 0.0
  %996 = vmatpush2.msra.mxu0 0.0
  %997 = vmatprep.subr.mxu0 0.0
  %998 = vmatpush2.msra.mxu0 0.0
  %999 = vmatprep.subr.mxu0 0.0
  %1000 = vmatpush2.msra.mxu0 0.0
  %1001 = vmatprep.subr.mxu0 0.0
  %1002 = vmatpush2.msra.mxu0 0.0
  %1003 = vmatprep.subr.mxu0 0.0
  %1004 = vmatpush2.msra.mxu0 0.0
  %1005 = vmatprep.subr.mxu0 0.0
  %1006 = vmatpush2.msra.mxu0 0.0
  %1007 = vmatprep.subr.mxu0 0.0
  %1008 = vmatpush2.msra.mxu0 0.0
  %1009 = vmatprep.subr.mxu0 0.0
  %1010 = vmatpush2.msra.mxu0 0.0
  %1011 = vmatprep.subr.mxu0 0.0
  %1012 = vmatpush2.msra.mxu0 0.0
  %1013 = vmatprep.subr.mxu0 0.0
  %1014 = vmatpush2.msra.mxu0 0.0
  %1015 = vmatprep.subr.mxu0 0.0
  %1016 = vmatpush2.msra.mxu0 0.0
  %1017 = vmatprep.subr.mxu0 0.0
  %1018 = vmatpush2.msra.mxu0 0.0
  %1019 = vmatprep.subr.mxu0 0.0
  %1020 = vmatpush2.msra.mxu0 0.0
  %1021 = vmatprep.subr.mxu0 0.0
  %1022 = vmatpush2.msra.mxu0 0.0
  %1023 = vmatprep.subr.mxu0 0.0
  %1024 = vmatpush2.msra.mxu0 0.0
  %1025 = vmatprep.subr.mxu0 0.0
  %1026 = vmatpush2.msra.mxu0 0.0
  %1027 = vmatprep.mubr.f32.mxu0 0.0
  %1028 = vmatmul.mubr.f32.gmra.mxu0 %v961
  %v1029 = vpop.f32.mrf.mxu0
  %v1030 = vadd.f32 %v958, %v1029
  %v1031 = vpop.f32.mrf.mxu0
  %v1032 = vadd.f32 %v958, %v1031
  %1033 = vdwg.mxu0
  %1034 = vmatprep.subr.mxu0 0.0
  %1035 = vmatpush1.msra.mxu0 0.0
  %1036 = vmatprep.subr.mxu0 0.0
  %1037 = vmatpush1.msra.mxu0 0.0
  %1038 = vmatprep.subr.mxu0 0.0
  %1039 = vmatpush1.msra.mxu0 0.0
  %1040 = vmatprep.subr.mxu0 0.0
  %1041 = vmatpush1.msra.mxu0 0.0
  %1042 = vmatprep.subr.mxu0 0.0
  %1043 = vmatpush1.msra.mxu0 0.0
  %1044 = vmatprep.subr.mxu0 0.0
  %1045 = vmatpush1.msra.mxu0 0.0
  %1046 = vmatprep.subr.mxu0 0.0
  %1047 = vmatpush1.msra.mxu0 0.0
  %1048 = vmatprep.subr.mxu0 %v953
  %1049 = vmatpush1.msra.mxu0 %v952
  %1050 = vmatprep.subr.mxu0 %v949
  %1051 = vmatpush1.msra.mxu0 %v948
  %1052 = vmatprep.subr.mxu0 %v945
  %1053 = vmatpush1.msra.mxu0 %v944
  %1054 = vmatprep.subr.mxu0 %v941
  %1055 = vmatpush1.msra.mxu0 %v940
  %1056 = vmatprep.subr.mxu0 %v937
  %1057 = vmatpush1.msra.mxu0 %v936
  %1058 = vmatprep.subr.mxu0 %v933
  %1059 = vmatpush1.msra.mxu0 %v932
  %1060 = vmatprep.subr.mxu0 %v929
  %1061 = vmatpush1.msra.mxu0 %v928
  %1062 = vmatprep.subr.mxu0 %v925
  %1063 = vmatpush1.msra.mxu0 %v924
  %1064 = vmatprep.subr.mxu0 %v921
  %1065 = vmatpush1.msra.mxu0 %v920
  %1066 = vmatprep.subr.mxu0 0.0
  %1067 = vmatpush2.msra.mxu0 0.0
  %1068 = vmatprep.subr.mxu0 0.0
  %1069 = vmatpush2.msra.mxu0 0.0
  %1070 = vmatprep.subr.mxu0 0.0
  %1071 = vmatpush2.msra.mxu0 0.0
  %1072 = vmatprep.subr.mxu0 0.0
  %1073 = vmatpush2.msra.mxu0 0.0
  %1074 = vmatprep.subr.mxu0 0.0
  %1075 = vmatpush2.msra.mxu0 0.0
  %1076 = vmatprep.subr.mxu0 0.0
  %1077 = vmatpush2.msra.mxu0 0.0
  %1078 = vmatprep.subr.mxu0 0.0
  %1079 = vmatpush2.msra.mxu0 0.0
  %1080 = vmatprep.subr.mxu0 0.0
  %1081 = vmatpush2.msra.mxu0 0.0
  %1082 = vmatprep.subr.mxu0 0.0
  %1083 = vmatpush2.msra.mxu0 0.0
  %1084 = vmatprep.subr.mxu0 0.0
  %1085 = vmatpush2.msra.mxu0 0.0
  %1086 = vmatprep.subr.mxu0 0.0
  %1087 = vmatpush2.msra.mxu0 0.0
  %1088 = vmatprep.subr.mxu0 0.0
  %1089 = vmatpush2.msra.mxu0 0.0
  %1090 = vmatprep.subr.mxu0 0.0
  %1091 = vmatpush2.msra.mxu0 0.0
  %1092 = vmatprep.subr.mxu0 0.0
  %1093 = vmatpush2.msra.mxu0 0.0
  %1094 = vmatprep.subr.mxu0 0.0
  %1095 = vmatpush2.msra.mxu0 0.0
  %1096 = vmatprep.subr.mxu0 0.0
  %1097 = vmatpush2.msra.mxu0 0.0
  %1098 = vmatprep.mubr.f32.mxu0 0.0
  %1099 = vmatmul.mubr.f32.gmra.mxu0 %v961
  %v1100 = vpop.f32.mrf.mxu0
  %v1101 = vadd.f32 %v958, %v1100
  %v1102 = vpop.f32.mrf.mxu0
  %v1103 = vadd.f32 %v958, %v1102
  %1104 = vdwg.mxu0
  %v1105 = vadd.f32 %v1030, %v23
  %v1106 = vadd.f32 %v1032, %v24
  %v1107 = vadd.f32 %v1101, %v25
  %v1108 = vadd.f32 %v1103, %v26
  %v1109 = vmax.f32 %v1105, 0.0
  %v1110 = vmax.f32 %v1106, 0.0
  %v1111 = vmax.f32 %v1107, 0.0
  %v1112 = vmax.f32 %v1108, 0.0
  %1113 = vst [vmem:[%s6] sm:$0xff] %v1109
  %1114 = vst [vmem:[%s6 + $0x8] sm:$0xff] %v1110
  %1115 = vst [vmem:[%s6 + $0x10] sm:$0xff] %v1111
  %1116 = vst [vmem:[%s6 + $0x18] sm:$0xff] %v1112
  // Predicated region
  $region26: #{basic_block_forward.1} parent=0 // pred_check
    _
  $region27: #{basic_block_forward.1} parent=0 // pred_check_branch
    %1118 = sbr.rel (0) target = $region29
  $region28: #{basic_block_forward.1} parent=0 // pred_region
    _
  $region29: #{basic_block_forward.1} parent=0 // pred_fallthru
    _
  // Predicated region
  $region30: #{basic_block_forward.1} parent=0 // pred_check
    _
  $region31: #{basic_block_forward.1} parent=0 // pred_check_branch
    %1120 = sbr.rel (0) target = $region33
  $region32: #{basic_block_forward.1} parent=0 // pred_region
    _
  $region33: #{basic_block_forward.1} parent=0 // pred_fallthru
    _

</llo_original>
